<compile_context>
chip_gen: v5e
topology: v5e:2x2
jax: 0.10.0
libtpu: 0.0.40
codegen_flags: <defaults>
</compile_context>

<pallas_src>
import jax
import jax.numpy as jnp
from jax.experimental import pallas as pl
from jax.experimental.pallas import tpu as pltpu


def _spatial_attention_kernel(obj_ref, h_ref, zmask_ref, params_ref,
                              out_ref, alphas_ref):
    B, n_obj, h_dim = obj_ref.shape

    obj = obj_ref[...]                                # (B, n_obj, h)  native
    obj_flat = obj.reshape(B * n_obj, h_dim)          # row index = b*n_obj + o
    hvec = h_ref[0]                                   # (B, h);  h is (1, B, h)

    # Packed params: rows [0, h) = [Ua | Wa]; row h = [ba | w_colsum].
    rhs = params_ref[0:h_dim, :]                      # (h, 2h)
    ba = params_ref[h_dim:h_dim + 1, 0:h_dim]         # (1, h)
    wsum = params_ref[h_dim:h_dim + 1, h_dim:]        # (1, h)

    # Single fused MXU call: [obj_flat ; h] @ [Ua | Wa] -> (B*n_obj + B, 2h).
    # Cross terms (obj@Wa, h@Ua) are wasted MXU columns — MXU has huge slack
    # at these shapes, and this halves push/pop count vs two matmuls.
    lhs = jnp.concatenate([obj_flat, hvec], axis=0)
    prod = jnp.dot(lhs, rhs, preferred_element_type=jnp.float32)

    image_part = (prod[:B * n_obj, :h_dim] + ba).reshape(B, n_obj, h_dim)
    d = prod[B * n_obj:, h_dim:]                      # (B, h) = h @ Wa

    e = jnp.tanh(image_part + d[:, None, :])          # (B, n_obj, h)

    # scores[b, o] = e[b, o, :] . w_colsum  (w pre-reduced over n_layers)
    scores = jnp.sum(e * wsum[None, :, :], axis=2)    # (B, n_obj)

    # Softmax over objects (= lane/last axis), then mask. PyTorch masks AFTER
    # softmax, so masked objects still contribute to the denominator.
    m = jnp.max(scores, axis=1, keepdims=True)
    ex = jnp.exp(scores - m)
    soft = ex / jnp.sum(ex, axis=1, keepdims=True)    # (B, n_obj)
    alphas_bn = soft * zmask_ref[...].T               # (B, n_obj)

    # Weighted sum over objects: out[b, :] = sum_o alphas[b, o] * obj[b, o, :]
    out_ref[...] = jnp.sum(alphas_bn[:, :, None] * obj, axis=1)   # (B, h)
    alphas_ref[...] = alphas_bn.T                                  # (n_obj, B)


def pack_spatial_attention_params(params):
    """One-time parameter packing: [Ua | Wa] stacked over [ba | sum_l(w)]."""
    w, ua, ba, wa = params["w"], params["ua"], params["ba"], params["wa"]
    h_dim = ua.shape[0]
    rhs = jnp.concatenate([ua, wa], axis=1)                           # (h, 2h)
    w_colsum = jnp.sum(w, axis=1).reshape(1, h_dim)                   # (1, h)
    tail = jnp.concatenate([ba.reshape(1, h_dim), w_colsum], axis=1)  # (1, 2h)
    return jnp.concatenate([rhs, tail], axis=0).astype(jnp.float32)   # (h+1, 2h)


def spatial_attention_forward(obj_embed, h, t, zeros_object, packed_params):
    """Pallas-backed SpatialAttention.forward (params pre-packed)."""
    del t  # unused by the reference PyTorch forward as well
    B, n_obj, h_dim = obj_embed.shape

    vmem = pl.BlockSpec(memory_space=pltpu.MemorySpace.VMEM)
    out, alphas = pl.pallas_call(
        _spatial_attention_kernel,
        out_shape=(jax.ShapeDtypeStruct((B, h_dim), jnp.float32),
                   jax.ShapeDtypeStruct((n_obj, B), jnp.float32)),
        in_specs=[vmem, vmem, vmem, vmem],
        out_specs=(vmem, vmem),
    )(obj_embed, h, zeros_object, packed_params)

    # Match PyTorch return: (B, 1, h_dim) and (n_obj, B). The [:, None, :] is
    # a metadata-only reshape (no data movement).
    return out[:, None, :], alphas


def _reference(obj_embed, h, zeros_object, params):
    """Plain-JAX transcription of the PyTorch forward, for validation."""
    w, ua, ba, wa = params["w"], params["ua"], params["ba"], params["wa"]
    obj = jnp.transpose(obj_embed, (1, 0, 2))                       # (n_obj, B, h)
    image_part = jnp.einsum("obh,hk->obk", obj, ua) + ba
    hp = jnp.transpose(h, (1, 0, 2))                                # (B, 1, h)
    d = jnp.einsum("bxh,hk->bxk", hp, wa)                           # (B, 1, h)
    e = jnp.tanh(jnp.transpose(d, (1, 0, 2)) + image_part)          # (n_obj, B, h)
    scores = jnp.sum(jnp.einsum("obh,hl->obl", e, w), axis=2)       # (n_obj, B)
    alphas = jax.nn.softmax(scores, axis=0) * zeros_object
    out = jnp.sum(alphas[:, :, None] * obj, axis=0)                 # (B, h)
    return out[:, None, :], alphas


if __name__ == "__main__":
    # Module hyper-params (small, consistent with the forward pass).
    h_dim, z_dim, n_layers, n_obj, B = 32, 16, 2, 8, 2

    key = jax.random.PRNGKey(0)
    k1, k2, k3, k4, k5, k6 = jax.random.split(key, 6)

    # Deterministic parameter init matching __init__ distributions.
    params = {
        "w":  0.5 * jax.random.normal(k1, (h_dim, n_layers), jnp.float32),
        "ua": 0.01 * jax.random.normal(k2, (h_dim, h_dim), jnp.float32),
        "ba": jnp.zeros((h_dim,), jnp.float32),
        "wa": 0.01 * jax.random.normal(k3, (h_dim, h_dim), jnp.float32),
    }
    packed = pack_spatial_attention_params(params)   # done once, not per call

    obj_embed = jax.random.normal(k4, (B, n_obj, h_dim), jnp.float32)
    h = jax.random.normal(k5, (1, B, h_dim), jnp.float32)
    t = jnp.zeros((), jnp.int32)  # unused, kept for signature parity
    zeros_object = (jax.random.uniform(k6, (n_obj, B)) > 0.25).astype(jnp.float32)

    out, alphas = spatial_attention_forward(obj_embed, h, t, zeros_object, packed)
    jax.block_until_ready((out, alphas))

    ref_out, ref_alphas = _reference(obj_embed, h, zeros_object, params)
    assert out.shape == (B, 1, h_dim) and alphas.shape == (n_obj, B)
    assert jnp.allclose(out, ref_out, atol=1e-4, rtol=1e-4)
    assert jnp.allclose(alphas, ref_alphas, atol=1e-4, rtol=1e-4)

    print("KERNEL_OK")
</pallas_src>

<mosaic_0001>
module attributes {stable_mosaic.version = 11 : i64} {
  func.func @_spatial_attention_kernel(%arg0: memref<2x8x32xf32, #tpu.memory_space<vmem>>, %arg1: memref<1x2x32xf32, #tpu.memory_space<vmem>>, %arg2: memref<8x2xf32, #tpu.memory_space<vmem>>, %arg3: memref<33x64xf32, #tpu.memory_space<vmem>>, %arg4: memref<2x32xf32, #tpu.memory_space<vmem>>, %arg5: memref<8x2xf32, #tpu.memory_space<vmem>>) attributes {dimension_semantics = [], scalar_prefetch = 0 : i64, scratch_operands = 0 : i64, tpu.core_type = #tpu.core_type<tc>} {
    %c0 = arith.constant 0 : index
    %c0_0 = arith.constant 0 : index
    %c0_1 = arith.constant 0 : index
    %0 = vector.load %arg0[%c0, %c0_0, %c0_1] : memref<2x8x32xf32, #tpu.memory_space<vmem>>, vector<2x8x32xf32>
    %1 = vector.shape_cast %0 : vector<2x8x32xf32> to vector<16x32xf32>
    %c0_2 = arith.constant 0 : index
    %c0_3 = arith.constant 0 : index
    %c0_4 = arith.constant 0 : index
    %2 = vector.load %arg1[%c0_2, %c0_3, %c0_4] : memref<1x2x32xf32, #tpu.memory_space<vmem>>, vector<1x2x32xf32>
    %3 = vector.shape_cast %2 : vector<1x2x32xf32> to vector<2x32xf32>
    %c0_5 = arith.constant 0 : index
    %c0_6 = arith.constant 0 : index
    %4 = vector.load %arg3[%c0_5, %c0_6] : memref<33x64xf32, #tpu.memory_space<vmem>>, vector<32x64xf32>
    %c32 = arith.constant 32 : index
    %c0_7 = arith.constant 0 : index
    %5 = vector.load %arg3[%c32, %c0_7] : memref<33x64xf32, #tpu.memory_space<vmem>>, vector<1x32xf32>
    %c32_8 = arith.constant 32 : index
    %c32_9 = arith.constant 32 : index
    %6 = vector.load %arg3[%c32_8, %c32_9] : memref<33x64xf32, #tpu.memory_space<vmem>>, vector<1x32xf32>
    %7 = tpu.concatenate %1, %3 in 0 : vector<16x32xf32>, vector<2x32xf32> -> vector<18x32xf32>
    %cst = arith.constant dense<0.000000e+00> : vector<18x64xf32>
    %8 = tpu.matmul %7, %4, %cst {dimension_numbers = #tpu.dot_dimension_numbers<[1], [0], [0], [1], [0, 0, 1, 1], [], []>} : vector<18x32xf32>, vector<32x64xf32>, vector<18x64xf32> -> vector<18x64xf32>
    %9 = vector.extract_strided_slice %8 {offsets = [0, 0], sizes = [16, 32], strides = [1, 1]} : vector<18x64xf32> to vector<16x32xf32>
    %10 = vector.broadcast %5 : vector<1x32xf32> to vector<16x32xf32>
    %11 = arith.addf %9, %10 : vector<16x32xf32>
    %12 = vector.shape_cast %11 : vector<16x32xf32> to vector<2x8x32xf32>
    %13 = vector.extract_strided_slice %8 {offsets = [16, 32], sizes = [2, 32], strides = [1, 1]} : vector<18x64xf32> to vector<2x32xf32>
    %14 = vector.shape_cast %13 : vector<2x32xf32> to vector<2x1x32xf32>
    %15 = vector.broadcast %14 : vector<2x1x32xf32> to vector<2x8x32xf32>
    %16 = arith.addf %12, %15 : vector<2x8x32xf32>
    %17 = math.tanh %16 : vector<2x8x32xf32>
    %18 = vector.shape_cast %6 : vector<1x32xf32> to vector<1x1x32xf32>
    %19 = vector.broadcast %18 : vector<1x1x32xf32> to vector<2x8x32xf32>
    %20 = arith.mulf %17, %19 : vector<2x8x32xf32>
    %cst_10 = arith.constant dense<0.000000e+00> : vector<2x8xf32>
    %21 = vector.multi_reduction <add>, %20, %cst_10 [2] : vector<2x8x32xf32> to vector<2x8xf32>
    %cst_11 = arith.constant dense<0xFF800000> : vector<2xf32>
    %22 = vector.multi_reduction <maximumf>, %21, %cst_11 [1] : vector<2x8xf32> to vector<2xf32>
    %23 = vector.shape_cast %22 : vector<2xf32> to vector<2x1xf32>
    %24 = vector.broadcast %23 : vector<2x1xf32> to vector<2x8xf32>
    %25 = arith.subf %21, %24 : vector<2x8xf32>
    %26 = math.exp %25 : vector<2x8xf32>
    %cst_12 = arith.constant dense<0.000000e+00> : vector<2xf32>
    %27 = vector.multi_reduction <add>, %26, %cst_12 [1] : vector<2x8xf32> to vector<2xf32>
    %28 = vector.shape_cast %27 : vector<2xf32> to vector<2x1xf32>
    %29 = vector.broadcast %28 : vector<2x1xf32> to vector<2x8xf32>
    %30 = arith.divf %26, %29 : vector<2x8xf32>
    %c0_13 = arith.constant 0 : index
    %c0_14 = arith.constant 0 : index
    %31 = vector.load %arg2[%c0_13, %c0_14] : memref<8x2xf32, #tpu.memory_space<vmem>>, vector<8x2xf32>
    %32 = tpu.transpose %31, [1, 0] : vector<8x2xf32> -> vector<2x8xf32>
    %33 = arith.mulf %30, %32 : vector<2x8xf32>
    %34 = vector.shape_cast %33 : vector<2x8xf32> to vector<2x8x1xf32>
    %35 = vector.broadcast %34 : vector<2x8x1xf32> to vector<2x8x32xf32>
    %36 = arith.mulf %35, %0 : vector<2x8x32xf32>
    %cst_15 = arith.constant dense<0.000000e+00> : vector<2x32xf32>
    %37 = vector.multi_reduction <add>, %36, %cst_15 [1] : vector<2x8x32xf32> to vector<2x32xf32>
    %c0_16 = arith.constant 0 : index
    %c0_17 = arith.constant 0 : index
    %38 = vector.load %arg4[%c0_16, %c0_17] : memref<2x32xf32, #tpu.memory_space<vmem>>, vector<2x32xf32>
    tpu.vector_store %arg4[%c0_16, %c0_17], %37 {strides = array<i32>} : memref<2x32xf32, #tpu.memory_space<vmem>>, vector<2x32xf32>,
    %39 = tpu.transpose %33, [1, 0] : vector<2x8xf32> -> vector<8x2xf32>
    %c0_18 = arith.constant 0 : index
    %c0_19 = arith.constant 0 : index
    %40 = vector.load %arg5[%c0_18, %c0_19] : memref<8x2xf32, #tpu.memory_space<vmem>>, vector<8x2xf32>
    tpu.vector_store %arg5[%c0_18, %c0_19], %39 {strides = array<i32>} : memref<8x2xf32, #tpu.memory_space<vmem>>, vector<8x2xf32>,
    return
  }
}

</mosaic_0001>

<llo_original>
// kernel: tpu_custom_call.1
$region0: #{tpu_custom_call.1}
  #allocation0 [shape = 'u32[]', space=smem, size = 0x4, offset = 0x4, fixed_abs, tag = 'smem constant byte address 0x4 - core index']
  #allocation1 [shape = 'u32[72,128]{1,0:T(1,128)}', space=vmem, size = 0x9000, scoped, tag = 'internal scratch']
  %s0 = inlined_call_operand.hbm [shape: f32[2,8,32], index: 0, kind: input, shape index: {}]
  %s1 = inlined_call_operand.vmem [shape: f32[1,2,32], index: 1, kind: input, shape index: {}]
  %s2 = inlined_call_operand.vmem [shape: f32[8,2], index: 2, kind: input, shape index: {}]
  %s3 = inlined_call_operand.hbm [shape: f32[33,64], index: 3, kind: input, shape index: {}]
  %s4 = inlined_call_operand.hbm [shape: f32[2,32], index: 4, kind: output, shape index: {0}]
  %s5 = inlined_call_operand.vmem [shape: f32[8,2], index: 5, kind: output, shape index: {1}]
  %6 = xla_tuple %s4, %s5
  %s7 = sld [smem:[#allocation0]]
  $region42: #{tpu_custom_call.1} parent=0
    _
  %s9 = ssub.s32 1, %s7
  %s10 = scalar_select 0, %s9, %s7
  $region1: #{tpu_custom_call.1} parent=0
    #allocation2 [shape = 'u8[8192]{0}', space=vmem, size = 0x2000, scoped, tag = 'input window, operand 0, single buffered']
    #allocation3 [shape = 's32[1]{0}', space=sflag, size = 0x4, scoped, tag = 'scoped memory for tpu_custom_call.1']
    #allocation4 [shape = 's32[1]{0}', space=sflag, size = 0x4, scoped, tag = 'scoped memory for tpu_custom_call.1']
    #allocation5 [shape = 'u8[20480]{0}', space=vmem, size = 0x5000, scoped, tag = 'input window, operand 3, single buffered']
    #allocation6 [shape = 's32[1]{0}', space=sflag, size = 0x4, scoped, tag = 'scoped memory for tpu_custom_call.1']
    #allocation7 [shape = 'u8[1024]{0}', space=vmem, size = 0x400, scoped, tag = 'output window, operand 0, single buffered']
    %11 = vsyncpa [#allocation3], 0
    %12 = vsyncpa [#allocation6], 0
    %13 = vsyncpa [#allocation4], 0
    // Predicated region
    $region2: #{tpu_custom_call.1} parent=1 // pred_check
      _
    $region3: #{tpu_custom_call.1} parent=1 // pred_check_branch
      %15 = sbr.rel (0) target = $region5
    $region4: #{tpu_custom_call.1} parent=1 // pred_region
      %17 = vsyncadd [#allocation3], 0
      %s18 = sshll.u32 %s0, 4
      %s19 = int_to_ptr.hbm [resolvable:$true] %s18
      %s20 = sshll.u32 [#allocation2], 4
      %s21 = int_to_ptr.vmem [resolvable:$true] %s20
      %26 = dma.hbm_to_vmem [thread:$0]  %s19, 256, %s21, [#allocation3], 128, 128, 8
    $region5: #{tpu_custom_call.1} parent=1 // pred_fallthru
      _
    // Predicated region
    $region6: #{tpu_custom_call.1} parent=1 // pred_check
      _
    $region7: #{tpu_custom_call.1} parent=1 // pred_check_branch
      %28 = sbr.rel (0) target = $region9
    $region8: #{tpu_custom_call.1} parent=1 // pred_region
      _
    $region9: #{tpu_custom_call.1} parent=1 // pred_fallthru
      _
    // Predicated region
    $region10: #{tpu_custom_call.1} parent=1 // pred_check
      _
    $region11: #{tpu_custom_call.1} parent=1 // pred_check_branch
      %30 = sbr.rel (0) target = $region13
    $region12: #{tpu_custom_call.1} parent=1 // pred_region
      _
    $region13: #{tpu_custom_call.1} parent=1 // pred_fallthru
      _
    // Predicated region
    $region14: #{tpu_custom_call.1} parent=1 // pred_check
      _
    $region15: #{tpu_custom_call.1} parent=1 // pred_check_branch
      %32 = sbr.rel (0) target = $region17
    $region16: #{tpu_custom_call.1} parent=1 // pred_region
      %34 = vsyncadd [#allocation6], 0
      %s35 = sshll.u32 %s3, 4
      %s36 = int_to_ptr.hbm [resolvable:$true] %s35
      %s37 = sshll.u32 [#allocation5], 4
      %s38 = int_to_ptr.vmem [resolvable:$true] %s37
      %43 = dma.hbm_to_vmem [thread:$0]  %s36, 640, %s38, [#allocation6], 128, 128, 8
    $region17: #{tpu_custom_call.1} parent=1 // pred_fallthru
      _
    // Predicated region
    $region18: #{tpu_custom_call.1} parent=1 // pred_check
      _
    $region19: #{tpu_custom_call.1} parent=1 // pred_check_branch
      %45 = sbr.rel (0) target = $region21
    $region20: #{tpu_custom_call.1} parent=1 // pred_region
      %47 = dma.done [#allocation3], 256
    $region21: #{tpu_custom_call.1} parent=1 // pred_fallthru
      _
    // Predicated region
    $region22: #{tpu_custom_call.1} parent=1 // pred_check
      _
    $region23: #{tpu_custom_call.1} parent=1 // pred_check_branch
      %49 = sbr.rel (0) target = $region25
    $region24: #{tpu_custom_call.1} parent=1 // pred_region
      %51 = dma.done [#allocation6], 640
    $region25: #{tpu_custom_call.1} parent=1 // pred_fallthru
      _
    %v52 = vld [vmem:[#allocation2] sm:$0xff]
    %v53 = vld [vmem:[#allocation2 + $0x8] sm:$0xff]
    %v54 = vld [vmem:[%s1] sm:$0x3]
    %v55 = vld [vmem:[#allocation5] sm:$0xff]
    %v56 = vld [vmem:[#allocation5 + $0x8] sm:$0xff]
    %v57 = vld [vmem:[#allocation5 + $0x10] sm:$0xff]
    %v58 = vld [vmem:[#allocation5 + $0x18] sm:$0xff]
    %v59 = vld [vmem:[#allocation5 + $0x20] sm:$0x1]
    %vm60 = vcmask 261120
    %v62 = vsel %vm60, %v52, 0
    %v65 = vsel %vm60, %v53, 0
    %v68 = vsel %vm60, %v54, 0
    %70 = vmatpush.msra.mxu0 0.0
    %71 = vmatpush.msra.mxu0 0.0
    %72 = vmatpush.msra.mxu0 0.0
    %73 = vmatpush.msra.mxu0 0.0
    %74 = vmatpush.msra.mxu0 0.0
    %75 = vmatpush.msra.mxu0 0.0
    %76 = vmatpush.msra.mxu0 0.0
    %77 = vmatpush.msra.mxu0 0.0
    %78 = vmatpush.msra.mxu0 0.0
    %79 = vmatpush.msra.mxu0 0.0
    %80 = vmatpush.msra.mxu0 0.0
    %81 = vmatpush.msra.mxu0 0.0
    %82 = vmatpush.msra.mxu0 %v58
    %83 = vmatpush.msra.mxu0 %v57
    %84 = vmatpush.msra.mxu0 %v56
    %85 = vmatpush.msra.mxu0 %v55
    %86 = vmatmul.f32.gmra.mxu0 %v62
    %v87 = vpop.f32.mrf.mxu0
    %v88 = vadd.f32 0.0, %v87
    %89 = vmatmul.f32.gmra.mxu0 %v65
    %v90 = vpop.f32.mrf.mxu0
    %v91 = vadd.f32 0.0, %v90
    %92 = vmatmul.f32.gmra.mxu0 %v68
    %v93 = vpop.f32.mrf.mxu0
    %v94 = vadd.f32 0.0, %v93
    %95 = vdwg.mxu0
    %v96 = vperm.slane %v59, 0
    %v97 = vadd.f32 %v88, %v96
    %v98 = vadd.f32 %v91, %v96
    %v100 = vrot.slane %v94, 1
    %v101 = vperm.slane %v94, 0
    %v102 = vperm.slane %v100, 0
    %103 = vrot.lane.b32.xlu0 %v101, 96
    %v104 = vpop.permute.xlu0 %103
    %105 = vrot.lane.b32.xlu0 %v102, 96
    %v106 = vpop.permute.xlu0 %105
    %v109 = vadd.f32 %v97, %v104
    %v110 = vadd.f32 %v98, %v106
    %v111 = vtanh.pop %v109
    %v112 = vtanh.pop %v110
    %114 = vrot.lane.b32.xlu0 %v96, 96
    %v115 = vpop.permute.xlu0 %114
    %v117 = vmul.f32 %v111, %v115
    %v118 = vmul.f32 %v112, %v115
    %v119 = vsel %vm60, %v117, 0.0
    %120 = vadd.xlane.f32.xlu0 %v119
    %v121 = vpop.xlane.xlu0 %120
    %v122 = vsel %vm60, %v118, 0.0
    %123 = vadd.xlane.f32.xlu0 %v122
    %v124 = vpop.xlane.xlu0 %123
    %v127 = vlaneseq
    %v128 = vand.u32 %v127, 127
    %v129 = vperm.slane %v121, %v128
    %v130 = vperm.slane %v124, %v128
    %vm131 = vcmask 1041409
    %v132 = vsel %vm131, %v130, %v129
    %vm134 = vcmask 58368
    %v135 = vsel %vm134, %v132, -inf
    %136 = vmax.xlane.f32.xlu0 %v135
    %v137 = vpop.xlane.xlu0 %136
    %v139 = vperm.slane %v137, 0
    %v140 = vperm.slane %v137, 1
    %v143 = vsub.f32 %v121, %v139
    %v144 = vsub.f32 %v124, %v140
    %v145 = vmul.f32 %v143, 1.442695
    %v146 = vpow.pop %v145
    %v147 = vmul.f32 %v144, 1.442695
    %v148 = vpow.pop %v147
    %151 = vset.pattern.permute.xlu0 0
    %152 = vperm.xlu0 %151, %v146
    %v153 = vpop.permute.xlu0 %152
    %154 = vset.pattern.permute.xlu0 0
    %155 = vperm.xlu0 %154, %v148
    %v156 = vpop.permute.xlu0 %155
    %v157 = vperm.slane %v153, %v128
    %v158 = vperm.slane %v156, %v128
    %v159 = vsel %vm131, %v158, %v157
    %v161 = vsel %vm134, %v159, 0.0
    %162 = vadd.xlane.f32.xlu0 %v161
    %v163 = vpop.xlane.xlu0 %162
    %v165 = vperm.slane %v163, 0
    %v166 = vperm.slane %v163, 1
    %v169 = vrcp.pop %v165
    %v170 = vmul.f32 %v165, %v169
    %v171 = vsub.f32 1.0, %v170
    %v172 = vmul.f32 %v169, %v171
    %v173 = vadd.f32 %v169, %v172
    %vm174 = vweird.f32 %v165
    %vm175 = vweird.f32 %v169
    %vm176 = vmor %vm174, %vm175
    %v177 = vsel %vm176, %v169, %v173
    %v178 = vand.u32 2147483647, %v165
    %vm179 = vcmp.eq.f32.partialorder %v178, 8.507059e+37
    %v180 = vand.u32 %v165, 2147483648
    %v181 = vor.u32 1.1754944e-38, %v180
    %v182 = vsel %vm179, %v181, %v177
    %v183 = vmul.f32 %v146, %v182
    %v184 = vrcp.pop %v166
    %v185 = vmul.f32 %v166, %v184
    %v186 = vsub.f32 1.0, %v185
    %v187 = vmul.f32 %v184, %v186
    %v188 = vadd.f32 %v184, %v187
    %vm189 = vweird.f32 %v166
    %vm190 = vweird.f32 %v184
    %vm191 = vmor %vm189, %vm190
    %v192 = vsel %vm191, %v184, %v188
    %v193 = vand.u32 2147483647, %v166
    %vm194 = vcmp.eq.f32.partialorder %v193, 8.507059e+37
    %v195 = vand.u32 %v166, 2147483648
    %v196 = vor.u32 1.1754944e-38, %v195
    %v197 = vsel %vm194, %v196, %v192
    %v198 = vmul.f32 %v148, %v197
    %v199 = vld [vmem:[%s2] sm:$0xff]
    %200 = vxpose.xlu0.b32.start [1/16] %v199, 128
    %201 = vxpose.xlu0.b32.cont [2/16] 0.0, 128
    %202 = vxpose.xlu0.b32.cont [3/16] 0.0, 128
    %203 = vxpose.xlu0.b32.cont [4/16] 0.0, 128
    %204 = vxpose.xlu0.b32.cont [5/16] 0.0, 128
    %205 = vxpose.xlu0.b32.cont [6/16] 0.0, 128
    %206 = vxpose.xlu0.b32.cont [7/16] 0.0, 128
    %207 = vxpose.xlu0.b32.cont [8/16] 0.0, 128
    %208 = vxpose.xlu0.b32.cont [9/16] 0.0, 128
    %209 = vxpose.xlu0.b32.cont [10/16] 0.0, 128
    %210 = vxpose.xlu0.b32.cont [11/16] 0.0, 128
    %211 = vxpose.xlu0.b32.cont [12/16] 0.0, 128
    %212 = vxpose.xlu0.b32.cont [13/16] 0.0, 128
    %213 = vxpose.xlu0.b32.cont [14/16] 0.0, 128
    %214 = vxpose.xlu0.b32.cont [15/16] 0.0, 128
    %215 = vxpose.xlu0.b32.end [16/16] 0.0, 128
    %v216 = vpop.trf.xlu0
    %v217 = vpop.trf.xlu0
    %v218 = vpop.trf.xlu0
    %v219 = vpop.trf.xlu0
    %v220 = vpop.trf.xlu0
    %v221 = vpop.trf.xlu0
    %v222 = vpop.trf.xlu0
    %v223 = vpop.trf.xlu0
    %v224 = vpop.trf.xlu0
    %v225 = vpop.trf.xlu0
    %v226 = vpop.trf.xlu0
    %v227 = vpop.trf.xlu0
    %v228 = vpop.trf.xlu0
    %v229 = vpop.trf.xlu0
    %v230 = vpop.trf.xlu0
    %v231 = vpop.trf.xlu0
    %v233 = vperm.slane %v216, 0
    %v234 = vlaneseq
    %v235 = vshrl.u32 %v234, 7
    %237 = vset.pattern.permute.xlu0 %v235
    %238 = vperm.xlu0 %237, %v233
    %v239 = vpop.permute.xlu0 %238
    %v240 = vperm.slane %v216, 1
    %v241 = vlaneseq
    %v242 = vshrl.u32 %v241, 7
    %244 = vset.pattern.permute.xlu0 %v242
    %245 = vperm.xlu0 %244, %v240
    %v246 = vpop.permute.xlu0 %245
    %v249 = vmul.f32 %v183, %v239
    %v250 = vmul.f32 %v198, %v246
    %252 = vset.pattern.permute.xlu0 0
    %253 = vperm.xlu0 %252, %v249
    %v254 = vpop.permute.xlu0 %253
    %257 = vset.pattern.permute.xlu0 0
    %258 = vperm.xlu0 %257, %v250
    %v259 = vpop.permute.xlu0 %258
    %v261 = vmul.f32 %v254, %v52
    %v262 = vmul.f32 %v259, %v53
    %v263 = vsel %vm60, %v261, 0.0
    %v264 = vrot.slane %v263, 4
    %v265 = vadd.f32 %v263, %v264
    %v266 = vrot.slane %v265, 2
    %v267 = vadd.f32 %v265, %v266
    %v268 = vrot.slane %v267, 1
    %v269 = vadd.f32 %v267, %v268
    %v270 = vsel %vm60, %v262, 0.0
    %v271 = vrot.slane %v270, 4
    %v272 = vadd.f32 %v270, %v271
    %v273 = vrot.slane %v272, 2
    %v274 = vadd.f32 %v272, %v273
    %v275 = vrot.slane %v274, 1
    %v276 = vadd.f32 %v274, %v275
    %v279 = vsel %vm131, %v276, %v269
    %vm281 = vcmask 254976
    %282 = vst.msk [vmem:[#allocation7] sm:$0x3] %vm281, %v279
    %v283 = vperm.slane %v254, %v128
    %v284 = vperm.slane %v259, %v128
    %v285 = vsel %vm131, %v284, %v283
    %287 = vxpose.xlu0.b32.start [1/16] %v285, 128
    %288 = vxpose.xlu0.b32.cont [2/16] 0.0, 128
    %289 = vxpose.xlu0.b32.cont [3/16] 0.0, 128
    %290 = vxpose.xlu0.b32.cont [4/16] 0.0, 128
    %291 = vxpose.xlu0.b32.cont [5/16] 0.0, 128
    %292 = vxpose.xlu0.b32.cont [6/16] 0.0, 128
    %293 = vxpose.xlu0.b32.cont [7/16] 0.0, 128
    %294 = vxpose.xlu0.b32.cont [8/16] 0.0, 128
    %295 = vxpose.xlu0.b32.cont [9/16] 0.0, 128
    %296 = vxpose.xlu0.b32.cont [10/16] 0.0, 128
    %297 = vxpose.xlu0.b32.cont [11/16] 0.0, 128
    %298 = vxpose.xlu0.b32.cont [12/16] 0.0, 128
    %299 = vxpose.xlu0.b32.cont [13/16] 0.0, 128
    %300 = vxpose.xlu0.b32.cont [14/16] 0.0, 128
    %301 = vxpose.xlu0.b32.cont [15/16] 0.0, 128
    %302 = vxpose.xlu0.b32.end [16/16] 0.0, 128
    %v303 = vpop.trf.xlu0
    %v304 = vpop.trf.xlu0
    %v305 = vpop.trf.xlu0
    %v306 = vpop.trf.xlu0
    %v307 = vpop.trf.xlu0
    %v308 = vpop.trf.xlu0
    %v309 = vpop.trf.xlu0
    %v310 = vpop.trf.xlu0
    %v311 = vpop.trf.xlu0
    %v312 = vpop.trf.xlu0
    %v313 = vpop.trf.xlu0
    %v314 = vpop.trf.xlu0
    %v315 = vpop.trf.xlu0
    %v316 = vpop.trf.xlu0
    %v317 = vpop.trf.xlu0
    %v318 = vpop.trf.xlu0
    %vm319 = vcmask 15360
    %320 = vst.msk [vmem:[%s5] sm:$0xff] %vm319, %v303
    // Predicated region
    $region26: #{tpu_custom_call.1} parent=1 // pred_check
      _
    $region27: #{tpu_custom_call.1} parent=1 // pred_check_branch
      %322 = sbr.rel (0) target = $region29
    $region28: #{tpu_custom_call.1} parent=1 // pred_region
      %324 = vsyncadd [#allocation4], 0
      %s326 = sshll.u32 [#allocation7], 4
      %s327 = int_to_ptr.vmem [resolvable:$true] %s326
      %s328 = sshll.u32 %s4, 4
      %s329 = int_to_ptr.hbm [resolvable:$true] %s328
      %331 = dma.vmem_to_hbm [thread:$0]  %s327, 32, %s329, [#allocation4]
    $region29: #{tpu_custom_call.1} parent=1 // pred_fallthru
      _
    // Predicated region
    $region30: #{tpu_custom_call.1} parent=1 // pred_check
      _
    $region31: #{tpu_custom_call.1} parent=1 // pred_check_branch
      %333 = sbr.rel (0) target = $region33
    $region32: #{tpu_custom_call.1} parent=1 // pred_region
      _
    $region33: #{tpu_custom_call.1} parent=1 // pred_fallthru
      _
    // Predicated region
    $region34: #{tpu_custom_call.1} parent=1 // pred_check
      _
    $region35: #{tpu_custom_call.1} parent=1 // pred_check_branch
      %335 = sbr.rel (0) target = $region37
    $region36: #{tpu_custom_call.1} parent=1 // pred_region
      %337 = dma.done [#allocation4], 32
    $region37: #{tpu_custom_call.1} parent=1 // pred_fallthru
      _
    // Predicated region
    $region38: #{tpu_custom_call.1} parent=1 // pred_check
      _
    $region39: #{tpu_custom_call.1} parent=1 // pred_check_branch
      %339 = sbr.rel (0) target = $region41
    $region40: #{tpu_custom_call.1} parent=1 // pred_region
      _
    $region41: #{tpu_custom_call.1} parent=1 // pred_fallthru
      _
    %340 = vsyncpa [#allocation3], 1
    %341 = vsyncpa [#allocation6], 1
    %342 = vsyncpa [#allocation4], 1

</llo_original>
